<compile_context>
chip_gen: v7x
topology: tpu7x:2x2x1
jax: 0.10.0
libtpu: 0.0.40
codegen_flags: <defaults>
</compile_context>

<pallas_src>
import functools

import jax
import jax.numpy as jnp
from jax.experimental import pallas as pl
from jax.experimental.pallas import tpu as pltpu

LANE = 128
_MIB = 1024 * 1024


def _round_up(x, m):
    return ((x + m - 1) // m) * m


def _default_vmem_limit():
    # Generation-aware scoped-VMEM request: ~75% of physical, capped at 96 MiB
    # (v5e/v6e: 96 MiB, v7x: 48 MiB).  Falls back to a v7x-safe value.
    try:
        cap = int(pltpu.get_tpu_info().vmem_capacity_bytes)
    except Exception:
        cap = 64 * _MIB
    return max(32 * _MIB, min(cap * 3 // 4, 96 * _MIB))


# ----------------------------------------------------------------------------
# 1x1 conv (+ folded BN) + ReLU  (used for the top / coarsest level)
# ----------------------------------------------------------------------------
def _conv1x1_kernel(x_ref, w_ref, b_ref, o_ref):
    # x: (tile_m, Cin) bf16, w: (Cin, Cp) bf16 (BN folded), b: (1, Cp) f32
    y = jnp.dot(x_ref[...], w_ref[...], preferred_element_type=jnp.float32)
    y = y + b_ref[...]
    o_ref[...] = jnp.maximum(y, 0.0).astype(o_ref.dtype)


def conv1x1_bn_relu(x_nhwc, w, b, *, tile_m_target=1024, vmem_limit=None,
                    out_dtype=jnp.bfloat16):
    N, H, W, Cin = x_nhwc.shape
    Cp = w.shape[1]
    M = N * H * W
    x2 = x_nhwc.reshape(M, Cin)
    if x2.dtype != jnp.bfloat16:
        x2 = x2.astype(jnp.bfloat16)   # matmul runs in bf16; keep HBM read bf16 too
    vmem_limit = vmem_limit or _default_vmem_limit()
    budget = int(0.6 * vmem_limit)

    tile_m = min(tile_m_target, _round_up(M, 8))
    while tile_m > 8:
        est = 2 * tile_m * (Cin + Cp) * 2 + Cin * Cp * 2 + 2 * tile_m * Cp * 4
        if est <= budget:
            break
        tile_m = max(8, _round_up(tile_m // 2, 8))

    out = pl.pallas_call(
        _conv1x1_kernel,
        out_shape=jax.ShapeDtypeStruct((M, Cp), out_dtype),
        grid=(pl.cdiv(M, tile_m),),          # ragged last tile: OOB rows dropped
        in_specs=[
            pl.BlockSpec((tile_m, Cin), lambda i: (i, 0)),
            pl.BlockSpec((Cin, Cp), lambda i: (0, 0)),
            pl.BlockSpec((1, Cp), lambda i: (0, 0)),
        ],
        out_specs=pl.BlockSpec((tile_m, Cp), lambda i: (i, 0)),
        compiler_params=pltpu.CompilerParams(
            dimension_semantics=("parallel",),
            vmem_limit_bytes=vmem_limit),
    )(x2, w, b.reshape(1, -1))
    return out.reshape(N, H, W, Cp)


# ----------------------------------------------------------------------------
# Fused: 1x1 conv (+BN) + ReLU  +  nearest-upsample(coarse) add  (top-down path)
# ----------------------------------------------------------------------------
def _conv1x1_upadd_kernel(x_ref, c_ref, w_ref, b_ref, o_ref, *, sh, sw):
    _, th, wf, cin = x_ref.shape
    cp = w_ref.shape[1]
    x = x_ref[...].reshape(th * wf, cin)                       # bf16
    y = jnp.dot(x, w_ref[...], preferred_element_type=jnp.float32) + b_ref[...]
    y = jnp.maximum(y, 0.0).reshape(1, th, wf, cp)             # lateral = relu(bn(conv))
    up = c_ref[...].astype(jnp.float32)                        # coarse lateral (post-add)
    if sh > 1:
        up = jnp.repeat(up, sh, axis=1)
    if sw > 1:
        up = jnp.repeat(up, sw, axis=2)
    o_ref[...] = (y + up).astype(o_ref.dtype)


def conv1x1_bn_relu_upadd(x_fine, coarse, w, b, *, tile_rows_target=32,
                          vmem_limit=None, out_dtype=jnp.bfloat16):
    """lateral = relu(bn(conv1x1(x_fine))) + nearest_upsample(coarse), one pass."""
    N, Hf, Wf, Cin = x_fine.shape
    _, Hc, Wc, Cp = coarse.shape
    assert Hf % Hc == 0 and Wf % Wc == 0
    sh, sw = Hf // Hc, Wf // Wc
    if x_fine.dtype != jnp.bfloat16:
        x_fine = x_fine.astype(jnp.bfloat16)
    vmem_limit = vmem_limit or _default_vmem_limit()
    budget = int(0.6 * vmem_limit)

    tc = max(1, min(Hc, max(1, tile_rows_target // sh)))   # coarse rows / block
    while tc > 1:
        th = tc * sh
        est = (2 * th * Wf * Cin * 2 + 2 * tc * Wc * Cp * 2 + 2 * th * Wf * Cp * 2
               + Cin * Cp * 2 + 2 * th * Wf * Cp * 4)
        if est <= budget:
            break
        tc -= 1
    th = tc * sh                                            # fine rows / block

    kernel = functools.partial(_conv1x1_upadd_kernel, sh=sh, sw=sw)
    return pl.pallas_call(
        kernel,
        out_shape=jax.ShapeDtypeStruct((N, Hf, Wf, Cp), out_dtype),
        grid=(N, pl.cdiv(Hc, tc)),
        in_specs=[
            pl.BlockSpec((1, th, Wf, Cin), lambda n, i: (n, i, 0, 0)),
            pl.BlockSpec((1, tc, Wc, Cp), lambda n, i: (n, i, 0, 0)),
            pl.BlockSpec((Cin, Cp), lambda n, i: (0, 0)),
            pl.BlockSpec((1, Cp), lambda n, i: (0, 0)),
        ],
        out_specs=pl.BlockSpec((1, th, Wf, Cp), lambda n, i: (n, i, 0, 0)),
        compiler_params=pltpu.CompilerParams(
            dimension_semantics=("parallel", "parallel"),
            vmem_limit_bytes=vmem_limit),
    )(x_fine, coarse, w, b.reshape(1, -1))


# ----------------------------------------------------------------------------
# 3x3 conv (+ folded BN) + ReLU, H-tiled, manual double-buffered halo DMA with
# in-VMEM zero padding (no pre-padded HBM copy of the input).
# ----------------------------------------------------------------------------
def _conv3x3_kernel(x_hbm, w_ref, b_ref, o_ref, xbuf, sem,
                    *, tile_h, W, cin, cout, n_h, n_img):
    n = pl.program_id(0)
    i = pl.program_id(1)
    total = n_img * n_h
    g = n * n_h + i            # global sequential step (grid is fully sequential)
    slot = g % 2
    wp = W + 2
    dt = xbuf.dtype

    def start_fetch(nn, ii, s):
        row0 = ii * tile_h
        # main rows -> interior of the halo slab (cols 1..W)
        pltpu.make_async_copy(
            x_hbm.at[nn, pl.ds(row0, tile_h)],
            xbuf.at[s, pl.ds(1, tile_h), pl.ds(1, W)],
            sem.at[s, 0],
        ).start()

        @pl.when(ii > 0)                     # top halo row exists
        def _():
            pltpu.make_async_copy(
                x_hbm.at[nn, pl.ds(row0 - 1, 1)],
                xbuf.at[s, pl.ds(0, 1), pl.ds(1, W)],
                sem.at[s, 1],
            ).start()

        @pl.when(ii == 0)                    # image top boundary -> zero halo row
        def _():
            xbuf[s, pl.ds(0, 1)] = jnp.zeros((1, wp, cin), dt)

        @pl.when(ii < n_h - 1)               # bottom halo row exists
        def _():
            pltpu.make_async_copy(
                x_hbm.at[nn, pl.ds(row0 + tile_h, 1)],
                xbuf.at[s, pl.ds(tile_h + 1, 1), pl.ds(1, W)],
                sem.at[s, 2],
            ).start()

        @pl.when(ii == n_h - 1)              # image bottom boundary -> zero halo row
        def _():
            xbuf[s, pl.ds(tile_h + 1, 1)] = jnp.zeros((1, wp, cin), dt)

    def wait_fetch(nn, ii, s):
        row0 = ii * tile_h
        pltpu.make_async_copy(               # identical descriptors to start_fetch
            x_hbm.at[nn, pl.ds(row0, tile_h)],
            xbuf.at[s, pl.ds(1, tile_h), pl.ds(1, W)],
            sem.at[s, 0],
        ).wait()

        @pl.when(ii > 0)
        def _():
            pltpu.make_async_copy(
                x_hbm.at[nn, pl.ds(row0 - 1, 1)],
                xbuf.at[s, pl.ds(0, 1), pl.ds(1, W)],
                sem.at[s, 1],
            ).wait()

        @pl.when(ii < n_h - 1)
        def _():
            pltpu.make_async_copy(
                x_hbm.at[nn, pl.ds(row0 + tile_h, 1)],
                xbuf.at[s, pl.ds(tile_h + 1, 1), pl.ds(1, W)],
                sem.at[s, 2],
            ).wait()

    @pl.when(g == 0)
    def _():
        # Zero the scratch once (left/right halo columns are never written by
        # any DMA, so they stay zero for the whole grid), then prime slot 0.
        xbuf[...] = jnp.zeros_like(xbuf)
        start_fetch(n, i, slot)

    @pl.when(g + 1 < total)                  # prefetch next block, incl. image wrap
    def _():
        g1 = g + 1
        start_fetch(g1 // n_h, g1 % n_h, 1 - slot)

    wait_fetch(n, i, slot)

    L = tile_h * wp

    def tap(dy):
        # Read only the rows this tap needs straight from the scratch ref.
        xs = xbuf[slot, pl.ds(dy, tile_h)].reshape(L, cin)     # bf16
        x1 = pltpu.roll(xs, shift=L - 1, axis=0)               # dx=1 (XLU)
        x2 = pltpu.roll(xs, shift=L - 2, axis=0)               # dx=2 (XLU)
        xcat = jnp.concatenate([xs, x1, x2], axis=1)           # (L, 3*cin)
        return jnp.dot(xcat, w_ref[dy], preferred_element_type=jnp.float32)

    acc = tap(0)               # acc initialized from the first dot (no zeros+add)
    acc = acc + tap(1)
    acc = acc + tap(2)
    y = acc.reshape(tile_h, wp, cout)[:, :W, :] + b_ref[...]
    o_ref[...] = jnp.maximum(y, 0.0)[None].astype(o_ref.dtype)


def _conv3x3_vmem_bytes(tile_h, W, cin, cout, out_itemsize):
    L = tile_h * (W + 2)
    xbuf = 2 * (tile_h + 2) * (W + 2) * cin * 2
    outb = 2 * tile_h * W * cout * out_itemsize
    wbuf = 2 * 3 * (3 * cin) * cout * 2
    vals = L * (3 * cin) * 2 + 3 * L * cin * 2 + 2 * L * cout * 4
    return xbuf + outb + wbuf + vals


def conv3x3_bn_relu(x_nhwc, w3, b, *, tile_h_target=40, vmem_limit=None,
                    out_dtype=jnp.bfloat16):
    N, H, W, Cin = x_nhwc.shape
    Cout = w3.shape[2]
    vmem_limit = vmem_limit or _default_vmem_limit()
    budget = int(0.6 * vmem_limit)
    out_isz = jnp.dtype(out_dtype).itemsize

    # tile_h: divisor of H (static DMA sizes), prefer sublane-aligned multiples
    # of 8, capped by the per-generation VMEM budget.
    divs = [d for d in range(1, H + 1) if H % d == 0]
    cand = [d for d in divs if d <= tile_h_target] or [min(divs)]
    fit = [d for d in cand if _conv3x3_vmem_bytes(d, W, Cin, Cout, out_isz) <= budget]
    pool = fit or [min(cand)]
    mult8 = [d for d in pool if d % 8 == 0]
    tile_h = max(mult8) if mult8 else max(pool)
    n_h = H // tile_h

    kernel = functools.partial(_conv3x3_kernel, tile_h=tile_h, W=W, cin=Cin,
                               cout=Cout, n_h=n_h, n_img=N)
    # TODO(synk): on v7x (2 TensorCores) split the row axis across cores via
    # core_map; here the grid is fully sequential so cross-image prefetch is exact.
    return pl.pallas_call(
        kernel,
        out_shape=jax.ShapeDtypeStruct((N, H, W, Cout), out_dtype),
        grid=(N, n_h),
        in_specs=[
            pl.BlockSpec(memory_space=pl.ANY),                     # lateral stays in HBM
            pl.BlockSpec((3, 3 * Cin, Cout), lambda n, i: (0, 0, 0)),
            pl.BlockSpec((1, Cout), lambda n, i: (0, 0)),
        ],
        out_specs=pl.BlockSpec((1, tile_h, W, Cout), lambda n, i: (n, i, 0, 0)),
        scratch_shapes=[
            pltpu.VMEM((2, tile_h + 2, W + 2, Cin), x_nhwc.dtype),
            pltpu.SemaphoreType.DMA((2, 3)),
        ],
        compiler_params=pltpu.CompilerParams(
            dimension_semantics=("arbitrary", "arbitrary"),
            vmem_limit_bytes=vmem_limit),
    )(x_nhwc, w3, b.reshape(1, -1))


# ----------------------------------------------------------------------------
# Parameter init (deterministic, mirrors nn.init.xavier_uniform_ + BN defaults)
# ----------------------------------------------------------------------------
def _xavier_uniform(key, cout, cin, k):
    fan_in = cin * k * k
    fan_out = cout * k * k
    bound = (6.0 / (fan_in + fan_out)) ** 0.5
    return jax.random.uniform(key, (cout, cin, k, k), jnp.float32, -bound, bound)


def _bn_scale_bias(cout, eps=1e-5):
    gamma = jnp.ones((cout,), jnp.float32)
    beta = jnp.zeros((cout,), jnp.float32)
    mean = jnp.zeros((cout,), jnp.float32)
    var = jnp.ones((cout,), jnp.float32)
    scale = gamma / jnp.sqrt(var + eps)
    bias = beta - mean * scale
    return scale, bias


class NeckPallas:
    def __init__(self, in_channels, out_channels=256, out_map=None,
                 start_level=0, end_level=None, key=None):
        self.in_channels = list(in_channels)
        if isinstance(out_channels, int):
            out_channels = [out_channels] * len(self.in_channels)
        self.out_channels = list(out_channels)
        self.out_map = out_map
        self.start_level = start_level
        self.end_level = len(self.in_channels) if end_level is None else end_level
        self.vmem_limit = _default_vmem_limit()

        if key is None:
            key = jax.random.PRNGKey(0)
        self.lateral_params = []   # (w (Cin, Cp) bf16, bias (Cp,) f32)
        self.fpn_params = []       # (w3 (3, 3*Cp, Cp) bf16, bias (Cp,) f32)
        for i in range(self.start_level, self.end_level):
            key, k1, k2 = jax.random.split(key, 3)
            cin, cout = self.in_channels[i], self.out_channels[i]
            cp = _round_up(cout, LANE)
            scale, bias = _bn_scale_bias(cout)
            # lateral 1x1: torch (Cout, Cin, 1, 1) -> (Cin, Cp), BN scale folded.
            lw = _xavier_uniform(k1, cout, cin, 1)[:, :, 0, 0] * scale[:, None]
            lw = jnp.zeros((cin, cp), jnp.float32).at[:, :cout].set(lw.T)
            lb = jnp.zeros((cp,), jnp.float32).at[:cout].set(bias)
            self.lateral_params.append((lw.astype(jnp.bfloat16), lb))
            # fpn 3x3: torch (Cout, Cout, 3, 3) -> (3, 3*Cp, Cp): per dy slab,
            # K rows [kx*Cp + cin_pad] correspond to tap (dy, kx).
            fw = _xavier_uniform(k2, cout, cout, 3) * scale[:, None, None, None]
            fw = jnp.transpose(fw, (2, 3, 1, 0))               # (ky, kx, cin, cout)
            fwp = jnp.zeros((3, 3, cp, cp), jnp.float32).at[:, :, :cout, :cout].set(fw)
            fb = jnp.zeros((cp,), jnp.float32).at[:cout].set(bias)
            self.fpn_params.append((fwp.reshape(3, 3 * cp, cp).astype(jnp.bfloat16), fb))

    def forward(self, inputs_nchw):
        assert len(inputs_nchw) == len(self.in_channels)
        # NCHW -> NHWC and f32 -> bf16 in one XLA pass at the module boundary.
        xs = [jnp.transpose(x, (0, 2, 3, 1)).astype(jnp.bfloat16)
              for x in inputs_nchw]

        used = self.end_level - self.start_level
        laterals = [None] * used

        # Top (coarsest used) level: plain lateral conv.
        # Note: like the previous version, ConvModule is assumed to include its
        # default ReLU (conv -> BN -> ReLU) on both lateral and fpn convs.
        w, bb = self.lateral_params[used - 1]
        laterals[used - 1] = conv1x1_bn_relu(
            xs[used - 1 + self.start_level], w, bb, vmem_limit=self.vmem_limit)

        # Top-down: nearest-upsample + add fused into the fine level's 1x1 conv.
        for j in range(used - 2, -1, -1):
            w, bb = self.lateral_params[j]
            xf = xs[j + self.start_level]
            coarse = laterals[j + 1]
            Hf, Wf = xf.shape[1], xf.shape[2]
            Hc, Wc = coarse.shape[1], coarse.shape[2]
            if Hf % Hc == 0 and Wf % Wc == 0:
                laterals[j] = conv1x1_bn_relu_upadd(
                    xf, coarse, w, bb, vmem_limit=self.vmem_limit)
            else:
                # TODO(synk): non-integer nearest-neighbour ratios fall back to
                # an unfused plain-JAX gather + add.
                lat = conv1x1_bn_relu(xf, w, bb, vmem_limit=self.vmem_limit)
                rows = (jnp.arange(Hf) * Hc) // Hf
                cols = (jnp.arange(Wf) * Wc) // Wf
                up = coarse[:, rows][:, :, cols]
                laterals[j] = (lat.astype(jnp.float32)
                               + up.astype(jnp.float32)).astype(lat.dtype)

        outs = [conv3x3_bn_relu(laterals[i], *self.fpn_params[i],
                                vmem_limit=self.vmem_limit)
                for i in range(used)]
        # Drop the lane-padding channels back to the module's out_channels.
        outs = [o[..., :self.out_channels[self.start_level + i]]
                for i, o in enumerate(outs)]
        if self.out_map is not None:
            outs = outs[self.out_map]
        # NHWC(bf16) -> NCHW(f32) once at the module interface.
        outs = [jnp.transpose(o, (0, 3, 1, 2)).astype(jnp.float32) for o in outs]
        return tuple(outs)


# ----------------------------------------------------------------------------
if __name__ == "__main__":
    key = jax.random.PRNGKey(0)
    kparam, kdata = jax.random.split(key)

    in_channels = [4, 8, 16]
    out_channels = 8
    spatial = [16, 8, 4]
    batch = 2

    neck = NeckPallas(in_channels, out_channels, key=kparam)

    dkeys = jax.random.split(kdata, len(in_channels))
    inputs = tuple(
        jax.random.normal(dkeys[i],
                          (batch, in_channels[i], spatial[i], spatial[i]),
                          jnp.float32)
        for i in range(len(in_channels))
    )

    outs = neck.forward(inputs)
    for o in outs:
        jax.block_until_ready(o)

    expected = [(batch, out_channels, s, s) for s in spatial]
    assert [tuple(o.shape) for o in outs] == expected, \
        f"shape mismatch: {[o.shape for o in outs]} vs {expected}"
    assert all(bool(jnp.all(jnp.isfinite(o))) for o in outs), "non-finite output"
    print("KERNEL_OK")
</pallas_src>

<mosaic_0001>
module attributes {stable_mosaic.version = 11 : i64} {
  func.func @_conv1x1_kernel(%arg0: i32, %arg1: memref<32x16xbf16, #tpu.memory_space<vmem>>, %arg2: memref<16x128xbf16, #tpu.memory_space<vmem>>, %arg3: memref<1x128xf32, #tpu.memory_space<vmem>>, %arg4: memref<32x128xbf16, #tpu.memory_space<vmem>>) attributes {dimension_semantics = [#tpu.dimension_semantics<parallel>], iteration_bounds = array<i64: 1>, scalar_prefetch = 0 : i64, scratch_operands = 0 : i64, tpu.core_type = #tpu.core_type<tc>, window_params = [{transform_indices = @transform_0, window_bounds = array<i64: 32, 16>}, {pipeline_mode = #tpu.pipeline_mode<synchronous>, transform_indices = @transform_1, window_bounds = array<i64: 16, 128>}, {pipeline_mode = #tpu.pipeline_mode<synchronous>, transform_indices = @transform_2, window_bounds = array<i64: 1, 128>}, {transform_indices = @transform_3, window_bounds = array<i64: 32, 128>}]} {
    %c0 = arith.constant 0 : index
    %c0_0 = arith.constant 0 : index
    %0 = vector.load %arg1[%c0, %c0_0] : memref<32x16xbf16, #tpu.memory_space<vmem>>, vector<32x16xbf16>
    %c0_1 = arith.constant 0 : index
    %c0_2 = arith.constant 0 : index
    %1 = vector.load %arg2[%c0_1, %c0_2] : memref<16x128xbf16, #tpu.memory_space<vmem>>, vector<16x128xbf16>
    %cst = arith.constant dense<0.000000e+00> : vector<32x128xf32>
    %2 = tpu.matmul %0, %1, %cst {dimension_numbers = #tpu.dot_dimension_numbers<[1], [0], [0], [1], [0, 0, 1, 1], [], []>} : vector<32x16xbf16>, vector<16x128xbf16>, vector<32x128xf32> -> vector<32x128xf32>
    %c0_3 = arith.constant 0 : index
    %c0_4 = arith.constant 0 : index
    %3 = vector.load %arg3[%c0_3, %c0_4] : memref<1x128xf32, #tpu.memory_space<vmem>>, vector<1x128xf32>
    %4 = vector.broadcast %3 : vector<1x128xf32> to vector<32x128xf32>
    %5 = arith.addf %2, %4 : vector<32x128xf32>
    %cst_5 = arith.constant 0.000000e+00 : f32
    %6 = vector.broadcast %cst_5 : f32 to vector<32x128xf32>
    %7 = arith.maximumf %5, %6 : vector<32x128xf32>
    %8 = arith.truncf %7 : vector<32x128xf32> to vector<32x128xbf16>
    %c0_6 = arith.constant 0 : index
    %c0_7 = arith.constant 0 : index
    %9 = vector.load %arg4[%c0_6, %c0_7] : memref<32x128xbf16, #tpu.memory_space<vmem>>, vector<32x128xbf16>
    tpu.vector_store %arg4[%c0_6, %c0_7], %8 {strides = array<i32>} : memref<32x128xbf16, #tpu.memory_space<vmem>>, vector<32x128xbf16>,
    return
  }
  func.func @transform_0(%arg0: i32) -> (i32, i32) {
    %c0_i32 = arith.constant 0 : i32
    %c0_i32_0 = arith.constant 0 : i32
    return %arg0, %c0_i32 : i32, i32
  }
  func.func @transform_1(%arg0: i32) -> (i32, i32) {
    %c0_i32 = arith.constant 0 : i32
    %c0_i32_0 = arith.constant 0 : i32
    %c0_i32_1 = arith.constant 0 : i32
    return %c0_i32, %c0_i32_0 : i32, i32
  }
  func.func @transform_2(%arg0: i32) -> (i32, i32) {
    %c0_i32 = arith.constant 0 : i32
    %c0_i32_0 = arith.constant 0 : i32
    %c0_i32_1 = arith.constant 0 : i32
    return %c0_i32, %c0_i32_0 : i32, i32
  }
  func.func @transform_3(%arg0: i32) -> (i32, i32) {
    %c0_i32 = arith.constant 0 : i32
    %c0_i32_0 = arith.constant 0 : i32
    return %arg0, %c0_i32 : i32, i32
  }
}

</mosaic_0001>

<llo_original>
// kernel: tpu_custom_call.1
$region0: #{tpu_custom_call.1}
  #allocation0 [shape = 'u32[]', space=smem, size = 0x4, offset = 0x4, fixed_abs, tag = 'smem constant byte address 0x4 - core index']
  #allocation1 [shape = 'u32[144,128]{1,0:T(1,128)}', space=vmem, size = 0x12000, scoped, tag = 'internal scratch']
  %s0 = inlined_call_operand.vmem [shape: bf16[32,16], index: 0, kind: input, shape index: {}]
  %s1 = inlined_call_operand.vmem [shape: bf16[16,128], index: 1, kind: input, shape index: {}]
  %s2 = inlined_call_operand.vmem [shape: f32[1,128], index: 2, kind: input, shape index: {}]
  %s3 = inlined_call_operand.hbm [shape: bf16[32,128], index: 3, kind: output, shape index: {}]
  %s4 = sld [smem:[#allocation0]]
  $region22: #{tpu_custom_call.1} parent=0
    _
  %s6 = ssub.s32 1, %s4
  %s7 = scalar_select 0, %s6, %s4
  $region1: #{tpu_custom_call.1} parent=0
    #allocation2 [shape = 'u8[8192]{0}', space=vmem, size = 0x2000, scoped, tag = 'output window, operand 0, single buffered']
    #allocation3 [shape = 's32[1]{0}', space=sflag, size = 0x4, scoped, tag = 'scoped memory for tpu_custom_call.1']
    %8 = vsyncpa [#allocation3], 0
    // Predicated region
    $region2: #{tpu_custom_call.1} parent=1 // pred_check
      _
    $region3: #{tpu_custom_call.1} parent=1 // pred_check_branch
      %10 = sbr.rel (0) target = $region5
    $region4: #{tpu_custom_call.1} parent=1 // pred_region
      _
    $region5: #{tpu_custom_call.1} parent=1 // pred_fallthru
      _
    // Predicated region
    $region6: #{tpu_custom_call.1} parent=1 // pred_check
      _
    $region7: #{tpu_custom_call.1} parent=1 // pred_check_branch
      %12 = sbr.rel (0) target = $region9
    $region8: #{tpu_custom_call.1} parent=1 // pred_region
      _
    $region9: #{tpu_custom_call.1} parent=1 // pred_fallthru
      _
    // Predicated region
    $region10: #{tpu_custom_call.1} parent=1 // pred_check
      _
    $region11: #{tpu_custom_call.1} parent=1 // pred_check_branch
      %14 = sbr.rel (0) target = $region13
    $region12: #{tpu_custom_call.1} parent=1 // pred_region
      _
    $region13: #{tpu_custom_call.1} parent=1 // pred_fallthru
      _
    %v16 = vld [vmem:[%s0] sm:$0xf]
    %v17 = vld [vmem:[%s0 + $0x4] sm:$0xf]
    %v18 = vld [vmem:[%s0 + $0x8] sm:$0xf]
    %v19 = vld [vmem:[%s0 + $0xc] sm:$0xf]
    %v20 = vld [vmem:[%s1] sm:$0xf]
    %v21 = vld [vmem:[%s1 + $0x4] sm:$0xf]
    %v22 = vld [vmem:[%s2] sm:$0x1]
    %v24 = vlaneseq
    %v25 = vshrl.u32 %v24, 7
    %v26 = vsub.s32 0, %v25
    %v27 = vrot.slane %v22, %v26
    %v33 = vunpack.c.l.b16 %v16
    %v34 = vunpack.c.l.b16 %v17
    %v35 = vunpack.c.l.b16 %v18
    %v36 = vunpack.c.l.b16 %v19
    %v37 = vpack.c.b16 %v34, %v33
    %v38 = vpack.c.b16 %v36, %v35
    %v41 = vunpack.c.l.b16 %v20
    %v42 = vunpack.c.l.b16 %v21
    %v43 = vpack.c.b16 %v42, %v41
    %vm45 = vcmask 130048
    %v47 = vsel %vm45, %v37, 0
    %v50 = vsel %vm45, %v38, 0
    %52 = vmatprep.subr.bf16.mxu0 0
    %53 = vmatpush1.bf16.msra.mxu0 %v43
    %54 = vmatprep.subr.bf16.mxu0 0
    %55 = vmatpush1.bf16.msra.mxu0 0
    %56 = vmatprep.subr.bf16.mxu0 0
    %57 = vmatpush1.bf16.msra.mxu0 0
    %58 = vmatprep.subr.bf16.mxu0 0
    %59 = vmatpush1.bf16.msra.mxu0 0
    %60 = vmatprep.subr.bf16.mxu0 0
    %61 = vmatpush1.bf16.msra.mxu0 0
    %62 = vmatprep.subr.bf16.mxu0 0
    %63 = vmatpush1.bf16.msra.mxu0 0
    %64 = vmatprep.subr.bf16.mxu0 0
    %65 = vmatpush1.bf16.msra.mxu0 0
    %66 = vmatprep.subr.bf16.mxu0 0
    %67 = vmatpush1.bf16.msra.mxu0 0
    %68 = vmatprep.subr.bf16.mxu0 0
    %69 = vmatpush1.bf16.msra.mxu0 0
    %70 = vmatprep.subr.bf16.mxu0 0
    %71 = vmatpush1.bf16.msra.mxu0 0
    %72 = vmatprep.subr.bf16.mxu0 0
    %73 = vmatpush1.bf16.msra.mxu0 0
    %74 = vmatprep.subr.bf16.mxu0 0
    %75 = vmatpush1.bf16.msra.mxu0 0
    %76 = vmatprep.subr.bf16.mxu0 0
    %77 = vmatpush1.bf16.msra.mxu0 0
    %78 = vmatprep.subr.bf16.mxu0 0
    %79 = vmatpush1.bf16.msra.mxu0 0
    %80 = vmatprep.subr.bf16.mxu0 0
    %81 = vmatpush1.bf16.msra.mxu0 0
    %82 = vmatprep.subr.bf16.mxu0 0
    %83 = vmatpush1.bf16.msra.mxu0 0
    %84 = vmatprep.mubr.bf16.mxu0 0
    %85 = vmatmul.mubr.bf16.gmra.mrb[0].mxu0 %v47
    %v86 = vpop.f32.mrb[0].mxu0
    %v87 = vadd.f32 %v27, %v86
    %v88 = vpop.f32.mrb[0].mxu0
    %v89 = vpop.f32.mrb[0].mxu0
    %v90 = vadd.f32 %v27, %v89
    %v91 = vpop.f32.mrb[0].mxu0
    %92 = vmatprep.mubr.bf16.mxu0 0
    %93 = vmatmul.mubr.bf16.gmra.mrb[0].mxu0 %v50
    %v94 = vpop.f32.mrb[0].mxu0
    %v95 = vadd.f32 %v27, %v94
    %v96 = vpop.f32.mrb[0].mxu0
    %v97 = vpop.f32.mrb[0].mxu0
    %v98 = vadd.f32 %v27, %v97
    %v99 = vpop.f32.mrb[0].mxu0
    %100 = vdwg.mxu0
    %v101 = vmax.f32 %v87, 0.0
    %v102 = vmax.f32 %v90, 0.0
    %v103 = vmax.f32 %v95, 0.0
    %v104 = vmax.f32 %v98, 0.0
    %v105 = vpack.c.bf16 %v102, %v101
    %v106 = vpack.c.bf16 %v104, %v103
    %v109 = vunpack.c.l.b16 %v105
    %v110 = vunpack.c.h.b16 %v105
    %v111 = vunpack.c.l.b16 %v106
    %v112 = vunpack.c.h.b16 %v106
    %v113 = vpack.c.b16 %v109, %v109
    %v114 = vpack.c.b16 %v110, %v110
    %v115 = vpack.c.b16 %v111, %v111
    %v116 = vpack.c.b16 %v112, %v112
    %121 = vst [vmem:[#allocation2] sm:$0xf] %v113
    %122 = vst [vmem:[#allocation2 + $0x4] sm:$0xf] %v114
    %123 = vst [vmem:[#allocation2 + $0x8] sm:$0xf] %v115
    %124 = vst [vmem:[#allocation2 + $0xc] sm:$0xf] %v116
    // Predicated region
    $region14: #{tpu_custom_call.1} parent=1 // pred_check
      _
    $region15: #{tpu_custom_call.1} parent=1 // pred_check_branch
      %126 = sbr.rel (0) target = $region17
    $region16: #{tpu_custom_call.1} parent=1 // pred_region
      %s128 = ssub.s32 256, 256
      %129 = vsyncadd [#allocation3], %s128
      %s130 = sshll.u32 [#allocation2], 4
      %s131 = int_to_ptr.vmem [resolvable:$true] %s130
      %136 = dma.vmem_to_hbm [thread:$0]  %s131, 256, %s3, [#allocation3], 64, 64, 4
    $region17: #{tpu_custom_call.1} parent=1 // pred_fallthru
      _
    // Predicated region
    $region18: #{tpu_custom_call.1} parent=1 // pred_check
      _
    $region19: #{tpu_custom_call.1} parent=1 // pred_check_branch
      %138 = sbr.rel (0) target = $region21
    $region20: #{tpu_custom_call.1} parent=1 // pred_region
      %139 = dma.done [#allocation3], 256
    $region21: #{tpu_custom_call.1} parent=1 // pred_fallthru
      _
    %140 = vsyncpa [#allocation3], 1

</llo_original>
